<compile_context>
chip_gen: v7x
topology: tpu7x:2x2x1
jax: 0.10.0
libtpu: 0.0.40
codegen_flags: <defaults>
</compile_context>

<pallas_src>
import functools
import math

import jax
import jax.numpy as jnp
from jax.experimental import pallas as pl
from jax.experimental.pallas import tpu as pltpu


# Scoped VMEM limit: 48 MiB is safe on v7x (64 MiB/TC) and leaves headroom on v5e/v6e;
# flash-style key tiling keeps per-step residency far below this anyway.
_VMEM_LIMIT = 48 * 1024 * 1024


# ------------------------------ spec helpers -------------------------------- #

def _full_spec(shape, grid_ndim):
    zeros = (0,) * len(shape)
    if grid_ndim == 1:
        return pl.BlockSpec(tuple(shape), lambda i: zeros)
    return pl.BlockSpec(tuple(shape), lambda i, j: zeros)


def _row_spec(rows, cols):
    return pl.BlockSpec((rows, cols), lambda i: (i, 0))


def _layer_norm(x, g, b, eps=1e-5):
    mu = jnp.mean(x, axis=-1, keepdims=True)
    var = jnp.mean((x - mu) ** 2, axis=-1, keepdims=True)
    return (x - mu) * jax.lax.rsqrt(var + eps) * g + b


# ----------------------------- Pallas kernels ------------------------------- #

def _gate_qkv_kernel(x_ref, pos_ref, sal_ref, spw_ref, spb_ref,
                     wqk_ref, bqk_ref, wv_ref, bv_ref,
                     q_ref, k_ref, v_ref, *, scale):
    """Fused enhance_score_predictor + salience gate + Q/K/V projections.

    Emits separate contiguous Q (pre-scaled by 1/sqrt(dh)), K and V arrays.
    """
    x = x_ref[...]                                    # [TQ, D] f32
    # score predictor as a broadcast-mul + lane reduction (avoids a [D,1] MXU push)
    logits = jnp.sum(x * spw_ref[...], axis=-1, keepdims=True) + spb_ref[...]
    gate = jax.nn.sigmoid(logits) * sal_ref[...]      # [TQ, 1] electron_prob * salience
    src = x * gate                                    # salience-enhanced source
    qk_in = (src + pos_ref[...]).astype(jnp.bfloat16)  # pos added to Q/K path only
    qk = jnp.dot(qk_in, wqk_ref[...], preferred_element_type=jnp.float32) + bqk_ref[...]
    d = x.shape[1]
    q_ref[...] = (qk[:, :d] * scale).astype(jnp.bfloat16)   # fold 1/sqrt(dh) into Q
    k_ref[...] = qk[:, d:].astype(jnp.bfloat16)
    v = jnp.dot(src.astype(jnp.bfloat16), wv_ref[...],
                preferred_element_type=jnp.float32) + bv_ref[...]
    v_ref[...] = v.astype(jnp.bfloat16)


def _attn_ffn_kernel(x_ref, q_ref, k_ref, v_ref, bidq_ref, bidk_ref,
                     wo_ref, bo_ref, ln1g_ref, ln1b_ref, ln2g_ref, ln2b_ref,
                     w1_ref, b1_ref, w2_ref, b2_ref, out_ref,
                     acc_ref, m_ref, l_ref, *, nhead):
    """Flash-style MHSA over key tiles + (on last key tile) wo/FFN/LayerNorms."""
    kj = pl.program_id(1)

    @pl.when(kj == 0)
    def _():
        m_ref[...] = jnp.full_like(m_ref, -1e30)
        l_ref[...] = jnp.zeros_like(l_ref)
        acc_ref[...] = jnp.zeros_like(acc_ref)

    q = q_ref[...]                                    # [TQ, D] bf16 (pre-scaled)
    k = k_ref[...]                                    # [TK, D] bf16
    v = v_ref[...]                                    # [TK, D] bf16
    tq, d = q.shape
    dh = d // nhead

    # batch mask rebuilt in-kernel from batch ids (no O(N^2) HBM traffic)
    mask = jnp.where(bidq_ref[...] == bidk_ref[...], 0.0, -1e9)  # [TQ, TK] f32

    for h in range(nhead):   # static unroll; each head is its own MXU push anyway
        lo = h * dh
        s = jax.lax.dot_general(q[:, lo:lo + dh], k[:, lo:lo + dh],
                                (((1,), (1,)), ((), ())),
                                preferred_element_type=jnp.float32) + mask
        m_prev = m_ref[:, h:h + 1]
        m_new = jnp.maximum(m_prev, jnp.max(s, axis=-1, keepdims=True))
        alpha = jnp.exp(m_prev - m_new)
        p = jnp.exp(s - m_new)                         # un-normalized probabilities
        l_ref[:, h:h + 1] = alpha * l_ref[:, h:h + 1] + jnp.sum(p, axis=-1, keepdims=True)
        acc_ref[:, lo:lo + dh] = alpha * acc_ref[:, lo:lo + dh] + jnp.dot(
            p.astype(jnp.bfloat16), v[:, lo:lo + dh], preferred_element_type=jnp.float32)
        m_ref[:, h:h + 1] = m_new

    @pl.when(kj == pl.num_programs(1) - 1)
    def _():
        # deferred softmax normalization: scale the [TQ, dh] accumulators, not [TQ, N]
        for h in range(nhead):
            lo = h * dh
            acc_ref[:, lo:lo + dh] = acc_ref[:, lo:lo + dh] * pl.reciprocal(
                l_ref[:, h:h + 1], approx=True)
        # single K=128 output projection on the lane-concatenated heads
        attn = jnp.dot(acc_ref[...].astype(jnp.bfloat16), wo_ref[...],
                       preferred_element_type=jnp.float32) + bo_ref[...]
        x1 = _layer_norm(x_ref[...] + attn, ln1g_ref[...], ln1b_ref[...])
        h1 = jnp.maximum(jnp.dot(x1.astype(jnp.bfloat16), w1_ref[...],
                                 preferred_element_type=jnp.float32) + b1_ref[...], 0.0)
        h2 = jnp.dot(h1.astype(jnp.bfloat16), w2_ref[...],
                     preferred_element_type=jnp.float32) + b2_ref[...]
        out_ref[...] = _layer_norm(x1 + h2, ln2g_ref[...], ln2b_ref[...])


def _background_kernel(xyl_ref, bg_ref, feat_ref, w_ref, out_ref):
    """FourierEncoding on (x, y, level) + in-kernel background select, one dense store."""
    xyl = xyl_ref[...]                                # [TM, 3] f32
    w = w_ref[...]                                    # [3, D/2] f32
    two_pi = 2.0 * jnp.pi
    # K=3 contraction done as 3 broadcast multiply-adds on the VPU (MXU-degenerate)
    proj = (xyl[:, 0:1] * w[0:1, :] + xyl[:, 1:2] * w[1:2, :]
            + xyl[:, 2:3] * w[2:3, :]) * two_pi       # [TM, D/2]
    enc = jnp.concatenate([jnp.sin(proj), jnp.cos(proj)], axis=-1)   # [TM, D]
    bg = bg_ref[...] > 0.0                            # [TM, 1]
    out_ref[...] = jnp.where(bg, enc, feat_ref[...])  # single full-width (lane-dense) store


# ------------------------------ pallas wrappers ------------------------------ #

def _gate_qkv_call(x, pos, sal, sp_w, sp_b, p, tq, scale):
    n_pad, d = x.shape
    grid = (n_pad // tq,)
    return pl.pallas_call(
        functools.partial(_gate_qkv_kernel, scale=scale),
        grid=grid,
        in_specs=[_row_spec(tq, d), _row_spec(tq, d), _row_spec(tq, 1),
                  _full_spec((1, d), 1), _full_spec((1, 1), 1),
                  _full_spec(p["wqk"].shape, 1), _full_spec((1, 2 * d), 1),
                  _full_spec(p["wv"].shape, 1), _full_spec((1, d), 1)],
        out_specs=[_row_spec(tq, d), _row_spec(tq, d), _row_spec(tq, d)],
        out_shape=(jax.ShapeDtypeStruct((n_pad, d), jnp.bfloat16),
                   jax.ShapeDtypeStruct((n_pad, d), jnp.bfloat16),
                   jax.ShapeDtypeStruct((n_pad, d), jnp.bfloat16)),
        compiler_params=pltpu.CompilerParams(
            dimension_semantics=("parallel",), vmem_limit_bytes=_VMEM_LIMIT),
    )(x, pos, sal, sp_w, sp_b, p["wqk"], p["bqk"], p["wv"], p["bv"])


def _attn_ffn_call(x, q, k, v, bid_col, bid_row, p, nhead, tq, tk):
    n_pad, d = x.shape
    ffn = p["w1"].shape[1]
    grid = (n_pad // tq, n_pad // tk)
    f = lambda s: _full_spec(s, 2)
    return pl.pallas_call(
        functools.partial(_attn_ffn_kernel, nhead=nhead),
        grid=grid,
        in_specs=[pl.BlockSpec((tq, d), lambda i, j: (i, 0)),    # x residual rows
                  pl.BlockSpec((tq, d), lambda i, j: (i, 0)),    # q rows (this tile)
                  pl.BlockSpec((tk, d), lambda i, j: (j, 0)),    # k tile
                  pl.BlockSpec((tk, d), lambda i, j: (j, 0)),    # v tile
                  pl.BlockSpec((tq, 1), lambda i, j: (i, 0)),    # query batch ids
                  pl.BlockSpec((1, tk), lambda i, j: (0, j)),    # key batch ids
                  f(p["wo"].shape), f((1, d)),
                  f((1, d)), f((1, d)), f((1, d)), f((1, d)),
                  f(p["w1"].shape), f((1, ffn)),
                  f(p["w2"].shape), f((1, d))],
        out_specs=pl.BlockSpec((tq, d), lambda i, j: (i, 0)),
        out_shape=jax.ShapeDtypeStruct((n_pad, d), jnp.float32),
        scratch_shapes=[pltpu.VMEM((tq, d), jnp.float32),        # per-head PV accumulator
                        pltpu.VMEM((tq, nhead), jnp.float32),    # running max
                        pltpu.VMEM((tq, nhead), jnp.float32)],   # running denom
        compiler_params=pltpu.CompilerParams(
            dimension_semantics=("parallel", "arbitrary"),
            vmem_limit_bytes=_VMEM_LIMIT),
    )(x, q, k, v, bid_col, bid_row,
      p["wo"], p["bo"], p["ln1g"], p["ln1b"], p["ln2g"], p["ln2b"],
      p["w1"], p["b1"], p["w2"], p["b2"])


def _background_call(xyl, bg, feat, w, tm):
    m_pad, d = feat.shape
    grid = (m_pad // tm,)
    return pl.pallas_call(
        _background_kernel,
        grid=grid,
        in_specs=[_row_spec(tm, 3), _row_spec(tm, 1), _row_spec(tm, d),
                  _full_spec(w.shape, 1)],
        out_specs=_row_spec(tm, d),
        out_shape=jax.ShapeDtypeStruct((m_pad, d), jnp.float32),
        compiler_params=pltpu.CompilerParams(
            dimension_semantics=("parallel",), vmem_limit_bytes=_VMEM_LIMIT),
    )(xyl, bg, feat, w)


# ------------------------------ parameter init ------------------------------- #

def init_layer_params(key, d_model, ffn):
    ks = jax.random.split(key, 6)
    s = 0.02
    bf = jnp.bfloat16
    return dict(
        wqk=(jax.random.normal(ks[0], (d_model, 2 * d_model), jnp.float32) * s).astype(bf),
        bqk=jnp.zeros((1, 2 * d_model), jnp.float32),
        wv=(jax.random.normal(ks[1], (d_model, d_model), jnp.float32) * s).astype(bf),
        bv=jnp.zeros((1, d_model), jnp.float32),
        wo=(jax.random.normal(ks[2], (d_model, d_model), jnp.float32) * s).astype(bf),
        bo=jnp.zeros((1, d_model), jnp.float32),
        ln1g=jnp.ones((1, d_model), jnp.float32),
        ln1b=jnp.zeros((1, d_model), jnp.float32),
        ln2g=jnp.ones((1, d_model), jnp.float32),
        ln2b=jnp.zeros((1, d_model), jnp.float32),
        w1=(jax.random.normal(ks[3], (d_model, ffn), jnp.float32) * s).astype(bf),
        b1=jnp.zeros((1, ffn), jnp.float32),
        w2=(jax.random.normal(ks[4], (ffn, d_model), jnp.float32) * s).astype(bf),
        b2=jnp.zeros((1, d_model), jnp.float32),
    )


# --------------------------------- forward ----------------------------------- #

def em_transformer_encoder_forward(
        stacked_feature_maps,      # [B, Hm, Wm, L, D] f32
        stacked_pos_encodings,     # [B, Hm, Wm, L, D] f32
        spatial_shapes,            # [L, 2] int32 (H_l, W_l)
        token_salience_scores,     # [B, N_TOK]
        token_ij_level_indices,    # [B, N_TOK, 3] (i, j, level)
        token_normalized_xy,       # [B, N_TOK, 2]  (unused by the simplified layer)
        token_layer_subset_idx,    # [B, NUM_LAYERS, K]
        layer_params, sp_w, sp_b, fourier_w, nhead,
        tq=128, tk=128, tm=512):
    del token_normalized_xy  # TODO(synk): only used by deformable sampling in the original layer
    B, Hm, Wm, L, D = stacked_feature_maps.shape
    num_layers = len(layer_params)
    K = token_layer_subset_idx.shape[2]
    N = B * K
    tile_lcm = tq * tk // math.gcd(tq, tk)
    n_pad = ((N + tile_lcm - 1) // tile_lcm) * tile_lcm
    pad = n_pad - N
    scale = 1.0 / ((D // nhead) ** 0.5)

    b_idx = jnp.repeat(jnp.arange(B, dtype=jnp.int32), K)                      # [N]
    bid_pad = jnp.concatenate([b_idx, -jnp.ones((pad,), jnp.int32)])           # [N_pad]
    bid_col = bid_pad[:, None]                                                 # [N_pad, 1]
    bid_row = bid_pad[None, :]                                                 # [1, N_pad]

    ii = jj = ll = None
    for layer_index in range(num_layers):
        idx = token_layer_subset_idx[:, layer_index]                           # [B, K]
        ij = jnp.take_along_axis(token_ij_level_indices, idx[..., None], axis=1)  # [B, K, 3]
        ii = ij[..., 0].reshape(-1)
        jj = ij[..., 1].reshape(-1)
        ll = ij[..., 2].reshape(-1)
        sal = jnp.take_along_axis(token_salience_scores, idx, axis=1).reshape(-1, 1)

        # TODO(synk): gather_from_sparse_tensor / scatter_to_sparse_tensor kept as plain
        #             XLA gather/scatter; a scalar-prefetch DMA row-gather plus an
        #             input_output_aliases row-scatter would remove the per-layer
        #             full-map HBM read+write at production sizes.
        query = stacked_feature_maps[b_idx, ii, jj, ll]                        # [N, D]
        posenc = stacked_pos_encodings[b_idx, ii, jj, ll]                      # [N, D]

        query_p = jnp.pad(query, ((0, pad), (0, 0)))
        pos_p = jnp.pad(posenc, ((0, pad), (0, 0)))
        sal_p = jnp.pad(sal, ((0, pad), (0, 0)))

        params = layer_params[layer_index]
        q, k, v = _gate_qkv_call(query_p, pos_p, sal_p, sp_w, sp_b, params, tq, scale)
        new_q = _attn_ffn_call(query_p, q, k, v, bid_col, bid_row, params, nhead, tq, tk)

        stacked_feature_maps = stacked_feature_maps.at[b_idx, ii, jj, ll].set(new_q[:N])

    # ----- background token fill (get_background_indices + FourierEncoding) -----
    # NOTE: like the reference, foreground = the LAST layer's gathered token indices.
    fg = jnp.zeros((B, Hm, Wm, L), jnp.bool_).at[b_idx, ii, jj, ll].set(True)
    ivec = jnp.arange(Hm)
    jvec = jnp.arange(Wm)
    Hl = spatial_shapes[:, 0]
    Wl = spatial_shapes[:, 1]
    valid = (ivec[:, None, None] < Hl[None, None, :]) & (jvec[None, :, None] < Wl[None, None, :])
    valid = jnp.broadcast_to(valid[None], (B, Hm, Wm, L))
    background = (valid & (~fg)).reshape(-1, 1).astype(jnp.float32)            # [M, 1]

    grid_i = jnp.broadcast_to(ivec[None, :, None, None], (B, Hm, Wm, L)).astype(jnp.float32)
    grid_j = jnp.broadcast_to(jvec[None, None, :, None], (B, Hm, Wm, L)).astype(jnp.float32)
    grid_l = jnp.broadcast_to(jnp.arange(L)[None, None, None, :], (B, Hm, Wm, L)).astype(jnp.float32)
    Hlf = Hl.astype(jnp.float32)[None, None, None, :]
    Wlf = Wl.astype(jnp.float32)[None, None, None, :]
    x_norm = (grid_j + 0.5) / Wlf
    y_norm = (grid_i + 0.5) / Hlf
    lvl_norm = grid_l / max(L - 1, 1)
    xyl = jnp.stack([x_norm, y_norm, lvl_norm], axis=-1).reshape(-1, 3)        # [M, 3]

    M = B * Hm * Wm * L
    m_pad = ((M + tm - 1) // tm) * tm
    padm = m_pad - M
    feat_flat = stacked_feature_maps.reshape(M, D)
    out_flat = _background_call(
        jnp.pad(xyl, ((0, padm), (0, 0))),
        jnp.pad(background, ((0, padm), (0, 0))),
        jnp.pad(feat_flat, ((0, padm), (0, 0))),
        fourier_w, tm)
    return out_flat[:M].reshape(B, Hm, Wm, L, D)


# ----------------------------------- main ------------------------------------- #

if __name__ == "__main__":
    B = 2
    D_MODEL = 128          # lane-dense d_model
    NHEAD = 4              # dh = 32
    FFN = 256
    NUM_LAYERS = 2
    L = 2
    HM, WM = 8, 8
    N_TOK = 12
    K_SUB = 8
    assert D_MODEL % NHEAD == 0 and D_MODEL % 2 == 0

    key = jax.random.PRNGKey(0)
    keys = jax.random.split(key, 32)

    spatial_shapes = jnp.array([[8, 8], [4, 4]], jnp.int32)   # per-level (H, W)

    stacked_feature_maps = jax.random.normal(keys[0], (B, HM, WM, L, D_MODEL), jnp.float32) * 0.1
    stacked_pos_encodings = jax.random.normal(keys[1], (B, HM, WM, L, D_MODEL), jnp.float32) * 0.1

    # mask out positions outside each level's spatial extent (sparse-tensor emulation)
    iv = jnp.arange(HM)
    jv = jnp.arange(WM)
    valid0 = (iv[:, None, None] < spatial_shapes[:, 0][None, None, :]) & \
             (jv[None, :, None] < spatial_shapes[:, 1][None, None, :])
    valid0 = jnp.broadcast_to(valid0[None, ..., None], (B, HM, WM, L, 1)).astype(jnp.float32)
    stacked_feature_maps = stacked_feature_maps * valid0
    stacked_pos_encodings = stacked_pos_encodings * valid0

    # tokens: (i, j, level) per batch + salience scores + per-layer subset indices
    tok_level = jax.random.randint(keys[2], (B, N_TOK), 0, L)
    h_l = spatial_shapes[tok_level, 0].astype(jnp.float32)
    w_l = spatial_shapes[tok_level, 1].astype(jnp.float32)
    u = jax.random.uniform(keys[3], (B, N_TOK, 2))
    tok_i = (u[..., 0] * h_l).astype(jnp.int32)
    tok_j = (u[..., 1] * w_l).astype(jnp.int32)
    token_ij_level_indices = jnp.stack([tok_i, tok_j, tok_level], axis=-1)           # [B, N_TOK, 3]
    token_normalized_xy = jnp.stack([(tok_j + 0.5) / w_l, (tok_i + 0.5) / h_l], -1)   # [B, N_TOK, 2]
    token_salience_scores = jax.random.uniform(keys[4], (B, N_TOK), jnp.float32)

    token_layer_subset_idx = jnp.stack([
        jnp.stack([jax.random.permutation(keys[5 + b * NUM_LAYERS + li], N_TOK)[:K_SUB]
                   for li in range(NUM_LAYERS)], axis=0)
        for b in range(B)], axis=0)                                                   # [B, NUM_LAYERS, K]

    # deterministic parameters
    layer_params = [init_layer_params(keys[10 + li], D_MODEL, FFN) for li in range(NUM_LAYERS)]
    sp_w = jax.random.normal(keys[20], (1, D_MODEL), jnp.float32) * 0.02
    sp_b = jnp.zeros((1, 1), jnp.float32)
    fourier_w = jax.random.normal(keys[21], (3, D_MODEL // 2), jnp.float32)

    out = em_transformer_encoder_forward(
        stacked_feature_maps, stacked_pos_encodings, spatial_shapes,
        token_salience_scores, token_ij_level_indices, token_normalized_xy,
        token_layer_subset_idx, layer_params, sp_w, sp_b, fourier_w, NHEAD)

    out = jax.block_until_ready(out)
    assert out.shape == (B, HM, WM, L, D_MODEL)
    assert bool(jnp.all(jnp.isfinite(out)))
    print("KERNEL_OK")
</pallas_src>

<mosaic_0001>
module attributes {stable_mosaic.version = 11 : i64} {
  func.func @_gate_qkv_kernel(%arg0: i32, %arg1: memref<128x128xf32, #tpu.memory_space<vmem>>, %arg2: memref<128x128xf32, #tpu.memory_space<vmem>>, %arg3: memref<128x1xf32, #tpu.memory_space<vmem>>, %arg4: memref<1x128xf32, #tpu.memory_space<vmem>>, %arg5: memref<1x1xf32, #tpu.memory_space<vmem>>, %arg6: memref<128x256xbf16, #tpu.memory_space<vmem>>, %arg7: memref<1x256xf32, #tpu.memory_space<vmem>>, %arg8: memref<128x128xbf16, #tpu.memory_space<vmem>>, %arg9: memref<1x128xf32, #tpu.memory_space<vmem>>, %arg10: memref<128x128xbf16, #tpu.memory_space<vmem>>, %arg11: memref<128x128xbf16, #tpu.memory_space<vmem>>, %arg12: memref<128x128xbf16, #tpu.memory_space<vmem>>) attributes {dimension_semantics = [#tpu.dimension_semantics<parallel>], iteration_bounds = array<i64: 1>, scalar_prefetch = 0 : i64, scratch_operands = 0 : i64, tpu.core_type = #tpu.core_type<tc>, window_params = [{transform_indices = @transform_0, window_bounds = array<i64: 128, 128>}, {transform_indices = @transform_1, window_bounds = array<i64: 128, 128>}, {transform_indices = @transform_2, window_bounds = array<i64: 128, 1>}, {pipeline_mode = #tpu.pipeline_mode<synchronous>, transform_indices = @transform_3, window_bounds = array<i64: 1, 128>}, {pipeline_mode = #tpu.pipeline_mode<synchronous>, transform_indices = @transform_4, window_bounds = array<i64: 1, 1>}, {pipeline_mode = #tpu.pipeline_mode<synchronous>, transform_indices = @transform_5, window_bounds = array<i64: 128, 256>}, {pipeline_mode = #tpu.pipeline_mode<synchronous>, transform_indices = @transform_6, window_bounds = array<i64: 1, 256>}, {pipeline_mode = #tpu.pipeline_mode<synchronous>, transform_indices = @transform_7, window_bounds = array<i64: 128, 128>}, {pipeline_mode = #tpu.pipeline_mode<synchronous>, transform_indices = @transform_8, window_bounds = array<i64: 1, 128>}, {transform_indices = @transform_9, window_bounds = array<i64: 128, 128>}, {transform_indices = @transform_10, window_bounds = array<i64: 128, 128>}, {transform_indices = @transform_11, window_bounds = array<i64: 128, 128>}]} {
    %c0 = arith.constant 0 : index
    %c0_0 = arith.constant 0 : index
    %0 = vector.load %arg1[%c0, %c0_0] : memref<128x128xf32, #tpu.memory_space<vmem>>, vector<128x128xf32>
    %c0_1 = arith.constant 0 : index
    %c0_2 = arith.constant 0 : index
    %1 = vector.load %arg4[%c0_1, %c0_2] : memref<1x128xf32, #tpu.memory_space<vmem>>, vector<1x128xf32>
    %2 = vector.broadcast %1 : vector<1x128xf32> to vector<128x128xf32>
    %3 = arith.mulf %0, %2 : vector<128x128xf32>
    %cst = arith.constant dense<0.000000e+00> : vector<128xf32>
    %4 = vector.multi_reduction <add>, %3, %cst [1] : vector<128x128xf32> to vector<128xf32>
    %5 = vector.shape_cast %4 : vector<128xf32> to vector<128x1xf32>
    %c0_3 = arith.constant 0 : index
    %c0_4 = arith.constant 0 : index
    %6 = vector.load %arg5[%c0_3, %c0_4] : memref<1x1xf32, #tpu.memory_space<vmem>>, vector<1x1xf32>
    %7 = vector.broadcast %6 : vector<1x1xf32> to vector<128x1xf32>
    %8 = arith.addf %5, %7 : vector<128x1xf32>
    %9 = arith.negf %8 : vector<128x1xf32>
    %10 = math.exp %9 : vector<128x1xf32>
    %cst_5 = arith.constant 1.000000e+00 : f32
    %11 = vector.broadcast %cst_5 : f32 to vector<128x1xf32>
    %12 = arith.addf %11, %10 : vector<128x1xf32>
    %13 = arith.divf %11, %12 : vector<128x1xf32>
    %c0_6 = arith.constant 0 : index
    %c0_7 = arith.constant 0 : index
    %14 = vector.load %arg3[%c0_6, %c0_7] : memref<128x1xf32, #tpu.memory_space<vmem>>, vector<128x1xf32>
    %15 = arith.mulf %13, %14 : vector<128x1xf32>
    %16 = vector.broadcast %15 : vector<128x1xf32> to vector<128x128xf32>
    %17 = arith.mulf %0, %16 : vector<128x128xf32>
    %c0_8 = arith.constant 0 : index
    %c0_9 = arith.constant 0 : index
    %18 = vector.load %arg2[%c0_8, %c0_9] : memref<128x128xf32, #tpu.memory_space<vmem>>, vector<128x128xf32>
    %19 = arith.addf %17, %18 : vector<128x128xf32>
    %20 = arith.truncf %19 : vector<128x128xf32> to vector<128x128xbf16>
    %c0_10 = arith.constant 0 : index
    %c0_11 = arith.constant 0 : index
    %21 = vector.load %arg6[%c0_10, %c0_11] : memref<128x256xbf16, #tpu.memory_space<vmem>>, vector<128x256xbf16>
    %cst_12 = arith.constant dense<0.000000e+00> : vector<128x256xf32>
    %22 = tpu.matmul %20, %21, %cst_12 {dimension_numbers = #tpu.dot_dimension_numbers<[1], [0], [0], [1], [0, 0, 1, 1], [], []>} : vector<128x128xbf16>, vector<128x256xbf16>, vector<128x256xf32> -> vector<128x256xf32>
    %c0_13 = arith.constant 0 : index
    %c0_14 = arith.constant 0 : index
    %23 = vector.load %arg7[%c0_13, %c0_14] : memref<1x256xf32, #tpu.memory_space<vmem>>, vector<1x256xf32>
    %24 = vector.broadcast %23 : vector<1x256xf32> to vector<128x256xf32>
    %25 = arith.addf %22, %24 : vector<128x256xf32>
    %26 = vector.extract_strided_slice %25 {offsets = [0, 0], sizes = [128, 128], strides = [1, 1]} : vector<128x256xf32> to vector<128x128xf32>
    %cst_15 = arith.constant 0.176776692 : f32
    %27 = vector.broadcast %cst_15 : f32 to vector<128x128xf32>
    %28 = arith.mulf %26, %27 : vector<128x128xf32>
    %29 = arith.truncf %28 : vector<128x128xf32> to vector<128x128xbf16>
    %c0_16 = arith.constant 0 : index
    %c0_17 = arith.constant 0 : index
    %30 = vector.load %arg10[%c0_16, %c0_17] : memref<128x128xbf16, #tpu.memory_space<vmem>>, vector<128x128xbf16>
    tpu.vector_store %arg10[%c0_16, %c0_17], %29 {strides = array<i32>} : memref<128x128xbf16, #tpu.memory_space<vmem>>, vector<128x128xbf16>,
    %31 = vector.extract_strided_slice %25 {offsets = [0, 128], sizes = [128, 128], strides = [1, 1]} : vector<128x256xf32> to vector<128x128xf32>
    %32 = arith.truncf %31 : vector<128x128xf32> to vector<128x128xbf16>
    %c0_18 = arith.constant 0 : index
    %c0_19 = arith.constant 0 : index
    %33 = vector.load %arg11[%c0_18, %c0_19] : memref<128x128xbf16, #tpu.memory_space<vmem>>, vector<128x128xbf16>
    tpu.vector_store %arg11[%c0_18, %c0_19], %32 {strides = array<i32>} : memref<128x128xbf16, #tpu.memory_space<vmem>>, vector<128x128xbf16>,
    %34 = arith.truncf %17 : vector<128x128xf32> to vector<128x128xbf16>
    %c0_20 = arith.constant 0 : index
    %c0_21 = arith.constant 0 : index
    %35 = vector.load %arg8[%c0_20, %c0_21] : memref<128x128xbf16, #tpu.memory_space<vmem>>, vector<128x128xbf16>
    %cst_22 = arith.constant dense<0.000000e+00> : vector<128x128xf32>
    %36 = tpu.matmul %34, %35, %cst_22 {dimension_numbers = #tpu.dot_dimension_numbers<[1], [0], [0], [1], [0, 0, 1, 1], [], []>} : vector<128x128xbf16>, vector<128x128xbf16>, vector<128x128xf32> -> vector<128x128xf32>
    %c0_23 = arith.constant 0 : index
    %c0_24 = arith.constant 0 : index
    %37 = vector.load %arg9[%c0_23, %c0_24] : memref<1x128xf32, #tpu.memory_space<vmem>>, vector<1x128xf32>
    %38 = vector.broadcast %37 : vector<1x128xf32> to vector<128x128xf32>
    %39 = arith.addf %36, %38 : vector<128x128xf32>
    %40 = arith.truncf %39 : vector<128x128xf32> to vector<128x128xbf16>
    %c0_25 = arith.constant 0 : index
    %c0_26 = arith.constant 0 : index
    %41 = vector.load %arg12[%c0_25, %c0_26] : memref<128x128xbf16, #tpu.memory_space<vmem>>, vector<128x128xbf16>
    tpu.vector_store %arg12[%c0_25, %c0_26], %40 {strides = array<i32>} : memref<128x128xbf16, #tpu.memory_space<vmem>>, vector<128x128xbf16>,
    return
  }
  func.func @transform_0(%arg0: i32) -> (i32, i32) {
    %c0_i32 = arith.constant 0 : i32
    %c0_i32_0 = arith.constant 0 : i32
    return %arg0, %c0_i32 : i32, i32
  }
  func.func @transform_1(%arg0: i32) -> (i32, i32) {
    %c0_i32 = arith.constant 0 : i32
    %c0_i32_0 = arith.constant 0 : i32
    return %arg0, %c0_i32 : i32, i32
  }
  func.func @transform_2(%arg0: i32) -> (i32, i32) {
    %c0_i32 = arith.constant 0 : i32
    %c0_i32_0 = arith.constant 0 : i32
    return %arg0, %c0_i32 : i32, i32
  }
  func.func @transform_3(%arg0: i32) -> (i32, i32) {
    %c0_i32 = arith.constant 0 : i32
    %c0_i32_0 = arith.constant 0 : i32
    %c0_i32_1 = arith.constant 0 : i32
    return %c0_i32, %c0_i32_0 : i32, i32
  }
  func.func @transform_4(%arg0: i32) -> (i32, i32) {
    %c0_i32 = arith.constant 0 : i32
    %c0_i32_0 = arith.constant 0 : i32
    %c0_i32_1 = arith.constant 0 : i32
    return %c0_i32, %c0_i32_0 : i32, i32
  }
  func.func @transform_5(%arg0: i32) -> (i32, i32) {
    %c0_i32 = arith.constant 0 : i32
    %c0_i32_0 = arith.constant 0 : i32
    %c0_i32_1 = arith.constant 0 : i32
    return %c0_i32, %c0_i32_0 : i32, i32
  }
  func.func @transform_6(%arg0: i32) -> (i32, i32) {
    %c0_i32 = arith.constant 0 : i32
    %c0_i32_0 = arith.constant 0 : i32
    %c0_i32_1 = arith.constant 0 : i32
    return %c0_i32, %c0_i32_0 : i32, i32
  }
  func.func @transform_7(%arg0: i32) -> (i32, i32) {
    %c0_i32 = arith.constant 0 : i32
    %c0_i32_0 = arith.constant 0 : i32
    %c0_i32_1 = arith.constant 0 : i32
    return %c0_i32, %c0_i32_0 : i32, i32
  }
  func.func @transform_8(%arg0: i32) -> (i32, i32) {
    %c0_i32 = arith.constant 0 : i32
    %c0_i32_0 = arith.constant 0 : i32
    %c0_i32_1 = arith.constant 0 : i32
    return %c0_i32, %c0_i32_0 : i32, i32
  }
  func.func @transform_9(%arg0: i32) -> (i32, i32) {
    %c0_i32 = arith.constant 0 : i32
    %c0_i32_0 = arith.constant 0 : i32
    return %arg0, %c0_i32 : i32, i32
  }
  func.func @transform_10(%arg0: i32) -> (i32, i32) {
    %c0_i32 = arith.constant 0 : i32
    %c0_i32_0 = arith.constant 0 : i32
    return %arg0, %c0_i32 : i32, i32
  }
  func.func @transform_11(%arg0: i32) -> (i32, i32) {
    %c0_i32 = arith.constant 0 : i32
    %c0_i32_0 = arith.constant 0 : i32
    return %arg0, %c0_i32 : i32, i32
  }
}

</mosaic_0001>

<llo_original>
// kernel: tpu_custom_call.1
$region0: #{tpu_custom_call.1}
  #allocation0 [shape = 'u32[]', space=smem, size = 0x4, offset = 0x4, fixed_abs, tag = 'smem constant byte address 0x4 - core index']
  #allocation1 [shape = 'u32[144,128]{1,0:T(1,128)}', space=vmem, size = 0x12000, scoped, tag = 'internal scratch']
  #allocation2 [shape = 'f32[1,1]{1,0:T(1,128)S(1)}', space=vmem, size = 0x200, scoped, tag = 'scoped memory for tpu_custom_call.1']
  %s0 = inlined_call_operand.vmem [shape: f32[128,128], index: 0, kind: input, shape index: {}]
  %s1 = inlined_call_operand.hbm [shape: f32[128,128], index: 1, kind: input, shape index: {}]
  %s2 = inlined_call_operand.vmem [shape: f32[128,1], index: 2, kind: input, shape index: {}]
  %s3 = inlined_call_operand.vmem [shape: f32[1,128], index: 3, kind: input, shape index: {}]
  %s4 = inlined_call_operand.<no memory space> [shape: f32[1,1], index: 4, kind: input, shape index: {}]
  %s5 = inlined_call_operand.hbm [shape: bf16[128,256], index: 5, kind: input, shape index: {}]
  %s6 = inlined_call_operand.vmem [shape: f32[1,256], index: 6, kind: input, shape index: {}]
  %s7 = inlined_call_operand.hbm [shape: bf16[128,128], index: 7, kind: input, shape index: {}]
  %s8 = inlined_call_operand.vmem [shape: f32[1,128], index: 8, kind: input, shape index: {}]
  %s9 = inlined_call_operand.hbm [shape: bf16[128,128], index: 9, kind: output, shape index: {0}]
  %s10 = inlined_call_operand.hbm [shape: bf16[128,128], index: 10, kind: output, shape index: {1}]
  %s11 = inlined_call_operand.hbm [shape: bf16[128,128], index: 11, kind: output, shape index: {2}]
  %12 = xla_tuple %s9, %s10, %s11
  %s13 = sld [smem:[#allocation0]]
  $region74: #{tpu_custom_call.1} parent=0
    _
  %s15 = ssub.s32 1, %s13
  %s16 = scalar_select 0, %s15, %s13
  %v17 = vstv %s4
  %18 = vst [vmem:[#allocation2] sm:$0x1] %v17
  $region1: #{tpu_custom_call.1} parent=0
    #allocation3 [shape = 'u8[65536]{0}', space=vmem, size = 0x10000, scoped, tag = 'input window, operand 1, single buffered']
    #allocation4 [shape = 's32[1]{0}', space=sflag, size = 0x4, scoped, tag = 'scoped memory for tpu_custom_call.1']
    #allocation5 [shape = 's32[1]{0}', space=sflag, size = 0x4, scoped, tag = 'scoped memory for tpu_custom_call.1']
    #allocation6 [shape = 'u8[65536]{0}', space=vmem, size = 0x10000, scoped, tag = 'input window, operand 5, single buffered']
    #allocation7 [shape = 's32[1]{0}', space=sflag, size = 0x4, scoped, tag = 'scoped memory for tpu_custom_call.1']
    #allocation8 [shape = 'u8[32768]{0}', space=vmem, size = 0x8000, scoped, tag = 'input window, operand 7, single buffered']
    #allocation9 [shape = 'u8[32768]{0}', space=vmem, size = 0x8000, scoped, tag = 'output window, operand 0, single buffered']
    #allocation10 [shape = 'u8[32768]{0}', space=vmem, size = 0x8000, scoped, tag = 'output window, operand 1, single buffered']
    #allocation11 [shape = 's32[1]{0}', space=sflag, size = 0x4, scoped, tag = 'scoped memory for tpu_custom_call.1']
    #allocation12 [shape = 'u8[32768]{0}', space=vmem, size = 0x8000, scoped, tag = 'output window, operand 2, single buffered']
    %19 = vsyncpa [#allocation4], 0
    %20 = vsyncpa [#allocation7], 0
    %21 = vsyncpa [#allocation5], 0
    %22 = vsyncpa [#allocation11], 0
    // Predicated region
    $region2: #{tpu_custom_call.1} parent=1 // pred_check
      _
    $region3: #{tpu_custom_call.1} parent=1 // pred_check_branch
      %24 = sbr.rel (0) target = $region5
    $region4: #{tpu_custom_call.1} parent=1 // pred_region
      _
    $region5: #{tpu_custom_call.1} parent=1 // pred_fallthru
      _
    // Predicated region
    $region6: #{tpu_custom_call.1} parent=1 // pred_check
      _
    $region7: #{tpu_custom_call.1} parent=1 // pred_check_branch
      %26 = sbr.rel (0) target = $region9
    $region8: #{tpu_custom_call.1} parent=1 // pred_region
      %s28 = ssub.s32 2048, 2048
      %29 = vsyncadd [#allocation4], %s28
      %s30 = sshll.u32 [#allocation3], 4
      %s31 = int_to_ptr.vmem [resolvable:$true] %s30
      %36 = dma.hbm_to_vmem [thread:$0]  %s1, 2048, %s31, [#allocation4], 128, 128, 8
    $region9: #{tpu_custom_call.1} parent=1 // pred_fallthru
      _
    // Predicated region
    $region10: #{tpu_custom_call.1} parent=1 // pred_check
      _
    $region11: #{tpu_custom_call.1} parent=1 // pred_check_branch
      %38 = sbr.rel (0) target = $region13
    $region12: #{tpu_custom_call.1} parent=1 // pred_region
      _
    $region13: #{tpu_custom_call.1} parent=1 // pred_fallthru
      _
    // Predicated region
    $region14: #{tpu_custom_call.1} parent=1 // pred_check
      _
    $region15: #{tpu_custom_call.1} parent=1 // pred_check_branch
      %40 = sbr.rel (0) target = $region17
    $region16: #{tpu_custom_call.1} parent=1 // pred_region
      _
    $region17: #{tpu_custom_call.1} parent=1 // pred_fallthru
      _
    // Predicated region
    $region18: #{tpu_custom_call.1} parent=1 // pred_check
      _
    $region19: #{tpu_custom_call.1} parent=1 // pred_check_branch
      %42 = sbr.rel (0) target = $region21
    $region20: #{tpu_custom_call.1} parent=1 // pred_region
      _
    $region21: #{tpu_custom_call.1} parent=1 // pred_fallthru
      _
    // Predicated region
    $region22: #{tpu_custom_call.1} parent=1 // pred_check
      _
    $region23: #{tpu_custom_call.1} parent=1 // pred_check_branch
      %44 = sbr.rel (0) target = $region25
    $region24: #{tpu_custom_call.1} parent=1 // pred_region
      %s46 = ssub.s32 2048, 2048
      %47 = vsyncadd [#allocation7], %s46
      %s48 = sshll.u32 [#allocation6], 4
      %s49 = int_to_ptr.vmem [resolvable:$true] %s48
      %54 = dma.hbm_to_vmem [thread:$0]  %s5, 2048, %s49, [#allocation7], 128, 128, 8
    $region25: #{tpu_custom_call.1} parent=1 // pred_fallthru
      _
    // Predicated region
    $region26: #{tpu_custom_call.1} parent=1 // pred_check
      _
    $region27: #{tpu_custom_call.1} parent=1 // pred_check_branch
      %56 = sbr.rel (0) target = $region29
    $region28: #{tpu_custom_call.1} parent=1 // pred_region
      _
    $region29: #{tpu_custom_call.1} parent=1 // pred_fallthru
      _
    // Predicated region
    $region30: #{tpu_custom_call.1} parent=1 // pred_check
      _
    $region31: #{tpu_custom_call.1} parent=1 // pred_check_branch
      %58 = sbr.rel (0) target = $region33
    $region32: #{tpu_custom_call.1} parent=1 // pred_region
      %s60 = ssub.s32 1024, 1024
      %61 = vsyncadd [#allocation7], %s60
      %s62 = sshll.u32 [#allocation8], 4
      %s63 = int_to_ptr.vmem [resolvable:$true] %s62
      %68 = dma.hbm_to_vmem [thread:$0]  %s7, 1024, %s63, [#allocation7], 64, 64, 4
    $region33: #{tpu_custom_call.1} parent=1 // pred_fallthru
      _
    // Predicated region
    $region34: #{tpu_custom_call.1} parent=1 // pred_check
      _
    $region35: #{tpu_custom_call.1} parent=1 // pred_check_branch
      %70 = sbr.rel (0) target = $region37
    $region36: #{tpu_custom_call.1} parent=1 // pred_region
      _
    $region37: #{tpu_custom_call.1} parent=1 // pred_fallthru
      _
    // Predicated region
    $region38: #{tpu_custom_call.1} parent=1 // pred_check
      _
    $region39: #{tpu_custom_call.1} parent=1 // pred_check_branch
      %72 = sbr.rel (0) target = $region41
    $region40: #{tpu_custom_call.1} parent=1 // pred_region
      %73 = dma.done [#allocation4], 2048
    $region41: #{tpu_custom_call.1} parent=1 // pred_fallthru
      _
    // Predicated region
    $region42: #{tpu_custom_call.1} parent=1 // pred_check
      _
    $region43: #{tpu_custom_call.1} parent=1 // pred_check_branch
      %75 = sbr.rel (0) target = $region45
    $region44: #{tpu_custom_call.1} parent=1 // pred_region
      %76 = dma.done [#allocation7], 2048
    $region45: #{tpu_custom_call.1} parent=1 // pred_fallthru
      _
    // Predicated region
    $region46: #{tpu_custom_call.1} parent=1 // pred_check
      _
    $region47: #{tpu_custom_call.1} parent=1 // pred_check_branch
      %78 = sbr.rel (0) target = $region49
    $region48: #{tpu_custom_call.1} parent=1 // pred_region
      %79 = dma.done [#allocation7], 1024
    $region49: #{tpu_custom_call.1} parent=1 // pred_fallthru
      _
    %v81 = vld [vmem:[%s0] sm:$0xff]
    %v82 = vld [vmem:[%s0 + $0x8] sm:$0xff]
    %v83 = vld [vmem:[%s0 + $0x10] sm:$0xff]
    %v84 = vld [vmem:[%s0 + $0x18] sm:$0xff]
    %v85 = vld [vmem:[%s0 + $0x20] sm:$0xff]
    %v86 = vld [vmem:[%s0 + $0x28] sm:$0xff]
    %v87 = vld [vmem:[%s0 + $0x30] sm:$0xff]
    %v88 = vld [vmem:[%s0 + $0x38] sm:$0xff]
    %v89 = vld [vmem:[%s0 + $0x40] sm:$0xff]
    %v90 = vld [vmem:[%s0 + $0x48] sm:$0xff]
    %v91 = vld [vmem:[%s0 + $0x50] sm:$0xff]
    %v92 = vld [vmem:[%s0 + $0x58] sm:$0xff]
    %v93 = vld [vmem:[%s0 + $0x60] sm:$0xff]
    %v94 = vld [vmem:[%s0 + $0x68] sm:$0xff]
    %v95 = vld [vmem:[%s0 + $0x70] sm:$0xff]
    %v96 = vld [vmem:[%s0 + $0x78] sm:$0xff]
    %v97 = vld [vmem:[%s3] sm:$0x1]
    %v99 = vlaneseq
    %v100 = vshrl.u32 %v99, 7
    %v101 = vsub.s32 0, %v100
    %v102 = vrot.slane %v97, %v101
    %v104 = vmul.f32 %v81, %v102
    %v105 = vmul.f32 %v82, %v102
    %v106 = vmul.f32 %v83, %v102
    %v107 = vmul.f32 %v84, %v102
    %v108 = vmul.f32 %v85, %v102
    %v109 = vmul.f32 %v86, %v102
    %v110 = vmul.f32 %v87, %v102
    %v111 = vmul.f32 %v88, %v102
    %v112 = vmul.f32 %v89, %v102
    %v113 = vmul.f32 %v90, %v102
    %v114 = vmul.f32 %v91, %v102
    %v115 = vmul.f32 %v92, %v102
    %v116 = vmul.f32 %v93, %v102
    %v117 = vmul.f32 %v94, %v102
    %v118 = vmul.f32 %v95, %v102
    %v119 = vmul.f32 %v96, %v102
    %120 = vadd.xlane.f32.xlu0 %v104
    %v121 = vpop.xlane.xlu0 %120
    %122 = vadd.xlane.f32.xlu0 %v105
    %v123 = vpop.xlane.xlu0 %122
    %124 = vadd.xlane.f32.xlu0 %v106
    %v125 = vpop.xlane.xlu0 %124
    %126 = vadd.xlane.f32.xlu0 %v107
    %v127 = vpop.xlane.xlu0 %126
    %128 = vadd.xlane.f32.xlu0 %v108
    %v129 = vpop.xlane.xlu0 %128
    %130 = vadd.xlane.f32.xlu0 %v109
    %v131 = vpop.xlane.xlu0 %130
    %132 = vadd.xlane.f32.xlu0 %v110
    %v133 = vpop.xlane.xlu0 %132
    %134 = vadd.xlane.f32.xlu0 %v111
    %v135 = vpop.xlane.xlu0 %134
    %136 = vadd.xlane.f32.xlu0 %v112
    %v137 = vpop.xlane.xlu0 %136
    %138 = vadd.xlane.f32.xlu0 %v113
    %v139 = vpop.xlane.xlu0 %138
    %140 = vadd.xlane.f32.xlu0 %v114
    %v141 = vpop.xlane.xlu0 %140
    %142 = vadd.xlane.f32.xlu0 %v115
    %v143 = vpop.xlane.xlu0 %142
    %144 = vadd.xlane.f32.xlu0 %v116
    %v145 = vpop.xlane.xlu0 %144
    %146 = vadd.xlane.f32.xlu0 %v117
    %v147 = vpop.xlane.xlu0 %146
    %148 = vadd.xlane.f32.xlu0 %v118
    %v149 = vpop.xlane.xlu0 %148
    %150 = vadd.xlane.f32.xlu0 %v119
    %v151 = vpop.xlane.xlu0 %150
    %v152 = vld [vmem:[#allocation2] sm:$0x1]
    %v154 = vlaneseq
    %v155 = vshrl.u32 %v154, 7
    %v156 = vsub.s32 0, %v155
    %v157 = vrot.slane %v152, %v156
    %v159 = vadd.f32 %v121, %v157
    %v160 = vadd.f32 %v123, %v157
    %v161 = vadd.f32 %v125, %v157
    %v162 = vadd.f32 %v127, %v157
    %v163 = vadd.f32 %v129, %v157
    %v164 = vadd.f32 %v131, %v157
    %v165 = vadd.f32 %v133, %v157
    %v166 = vadd.f32 %v135, %v157
    %v167 = vadd.f32 %v137, %v157
    %v168 = vadd.f32 %v139, %v157
    %v169 = vadd.f32 %v141, %v157
    %v170 = vadd.f32 %v143, %v157
    %v171 = vadd.f32 %v145, %v157
    %v172 = vadd.f32 %v147, %v157
    %v173 = vadd.f32 %v149, %v157
    %v174 = vadd.f32 %v151, %v157
    %v175 = vxor.u32 %v159, 2147483648
    %v176 = vxor.u32 %v160, 2147483648
    %v177 = vxor.u32 %v161, 2147483648
    %v178 = vxor.u32 %v162, 2147483648
    %v179 = vxor.u32 %v163, 2147483648
    %v180 = vxor.u32 %v164, 2147483648
    %v181 = vxor.u32 %v165, 2147483648
    %v182 = vxor.u32 %v166, 2147483648
    %v183 = vxor.u32 %v167, 2147483648
    %v184 = vxor.u32 %v168, 2147483648
    %v185 = vxor.u32 %v169, 2147483648
    %v186 = vxor.u32 %v170, 2147483648
    %v187 = vxor.u32 %v171, 2147483648
    %v188 = vxor.u32 %v172, 2147483648
    %v189 = vxor.u32 %v173, 2147483648
    %v190 = vxor.u32 %v174, 2147483648
    %v191 = vmul.f32 %v175, 1.442695
    %v192 = vpow.pop %v191
    %v193 = vmul.f32 %v176, 1.442695
    %v194 = vpow.pop %v193
    %v195 = vmul.f32 %v177, 1.442695
    %v196 = vpow.pop %v195
    %v197 = vmul.f32 %v178, 1.442695
    %v198 = vpow.pop %v197
    %v199 = vmul.f32 %v179, 1.442695
    %v200 = vpow.pop %v199
    %v201 = vmul.f32 %v180, 1.442695
    %v202 = vpow.pop %v201
    %v203 = vmul.f32 %v181, 1.442695
    %v204 = vpow.pop %v203
    %v205 = vmul.f32 %v182, 1.442695
    %v206 = vpow.pop %v205
    %v207 = vmul.f32 %v183, 1.442695
    %v208 = vpow.pop %v207
    %v209 = vmul.f32 %v184, 1.442695
    %v210 = vpow.pop %v209
    %v211 = vmul.f32 %v185, 1.442695
    %v212 = vpow.pop %v211
    %v213 = vmul.f32 %v186, 1.442695
    %v214 = vpow.pop %v213
    %v215 = vmul.f32 %v187, 1.442695
    %v216 = vpow.pop %v215
    %v217 = vmul.f32 %v188, 1.442695
    %v218 = vpow.pop %v217
    %v219 = vmul.f32 %v189, 1.442695
    %v220 = vpow.pop %v219
    %v221 = vmul.f32 %v190, 1.442695
    %v222 = vpow.pop %v221
    %v223 = vadd.f32 %v192, 1.0
    %v224 = vadd.f32 %v194, 1.0
    %v225 = vadd.f32 %v196, 1.0
    %v226 = vadd.f32 %v198, 1.0
    %v227 = vadd.f32 %v200, 1.0
    %v228 = vadd.f32 %v202, 1.0
    %v229 = vadd.f32 %v204, 1.0
    %v230 = vadd.f32 %v206, 1.0
    %v231 = vadd.f32 %v208, 1.0
    %v232 = vadd.f32 %v210, 1.0
    %v233 = vadd.f32 %v212, 1.0
    %v234 = vadd.f32 %v214, 1.0
    %v235 = vadd.f32 %v216, 1.0
    %v236 = vadd.f32 %v218, 1.0
    %v237 = vadd.f32 %v220, 1.0
    %v238 = vadd.f32 %v222, 1.0
    %v239 = vrcp.pop %v223
    %v240 = vmul.f32 1.0, %v239
    %v241 = vrcp.pop %v224
    %v242 = vmul.f32 1.0, %v241
    %v243 = vrcp.pop %v225
    %v244 = vmul.f32 1.0, %v243
    %v245 = vrcp.pop %v226
    %v246 = vmul.f32 1.0, %v245
    %v247 = vrcp.pop %v227
    %v248 = vmul.f32 1.0, %v247
    %v249 = vrcp.pop %v228
    %v250 = vmul.f32 1.0, %v249
    %v251 = vrcp.pop %v229
    %v252 = vmul.f32 1.0, %v251
    %v253 = vrcp.pop %v230
    %v254 = vmul.f32 1.0, %v253
    %v255 = vrcp.pop %v231
    %v256 = vmul.f32 1.0, %v255
    %v257 = vrcp.pop %v232
    %v258 = vmul.f32 1.0, %v257
    %v259 = vrcp.pop %v233
    %v260 = vmul.f32 1.0, %v259
    %v261 = vrcp.pop %v234
    %v262 = vmul.f32 1.0, %v261
    %v263 = vrcp.pop %v235
    %v264 = vmul.f32 1.0, %v263
    %v265 = vrcp.pop %v236
    %v266 = vmul.f32 1.0, %v265
    %v267 = vrcp.pop %v237
    %v268 = vmul.f32 1.0, %v267
    %v269 = vrcp.pop %v238
    %v270 = vmul.f32 1.0, %v269
    %v271 = vld [vmem:[%s2] sm:$0xff]
    %v272 = vld [vmem:[%s2 + $0x8] sm:$0xff]
    %v273 = vld [vmem:[%s2 + $0x10] sm:$0xff]
    %v274 = vld [vmem:[%s2 + $0x18] sm:$0xff]
    %v275 = vld [vmem:[%s2 + $0x20] sm:$0xff]
    %v276 = vld [vmem:[%s2 + $0x28] sm:$0xff]
    %v277 = vld [vmem:[%s2 + $0x30] sm:$0xff]
    %v278 = vld [vmem:[%s2 + $0x38] sm:$0xff]
    %v279 = vld [vmem:[%s2 + $0x40] sm:$0xff]
    %v280 = vld [vmem:[%s2 + $0x48] sm:$0xff]
    %v281 = vld [vmem:[%s2 + $0x50] sm:$0xff]
    %v282 = vld [vmem:[%s2 + $0x58] sm:$0xff]
    %v283 = vld [vmem:[%s2 + $0x60] sm:$0xff]
    %v284 = vld [vmem:[%s2 + $0x68] sm:$0xff]
    %v285 = vld [vmem:[%s2 + $0x70] sm:$0xff]
    %v286 = vld [vmem:[%s2 + $0x78] sm:$0xff]
    %v287 = vmul.f32 %v240, %v271
    %v288 = vmul.f32 %v242, %v272
    %v289 = vmul.f32 %v244, %v273
    %v290 = vmul.f32 %v246, %v274
    %v291 = vmul.f32 %v248, %v275
    %v292 = vmul.f32 %v250, %v276
    %v293 = vmul.f32 %v252, %v277
    %v294 = vmul.f32 %v254, %v278
    %v295 = vmul.f32 %v256, %v279
    %v296 = vmul.f32 %v258, %v280
    %v297 = vmul.f32 %v260, %v281
    %v298 = vmul.f32 %v262, %v282
    %v299 = vmul.f32 %v264, %v283
    %v300 = vmul.f32 %v266, %v284
    %v301 = vmul.f32 %v268, %v285
    %v302 = vmul.f32 %v270, %v286
    %304 = vset.pattern.permute.xlu0 0
    %305 = vperm.xlu0 %304, %v287
    %v306 = vpop.permute.xlu0 %305
    %309 = vset.pattern.permute.xlu0 0
    %310 = vperm.xlu0 %309, %v288
    %v311 = vpop.permute.xlu0 %310
    %314 = vset.pattern.permute.xlu0 0
    %315 = vperm.xlu0 %314, %v289
    %v316 = vpop.permute.xlu0 %315
    %319 = vset.pattern.permute.xlu0 0
    %320 = vperm.xlu0 %319, %v290
    %v321 = vpop.permute.xlu0 %320
    %324 = vset.pattern.permute.xlu0 0
    %325 = vperm.xlu0 %324, %v291
    %v326 = vpop.permute.xlu0 %325
    %329 = vset.pattern.permute.xlu0 0
    %330 = vperm.xlu0 %329, %v292
    %v331 = vpop.permute.xlu0 %330
    %334 = vset.pattern.permute.xlu0 0
    %335 = vperm.xlu0 %334, %v293
    %v336 = vpop.permute.xlu0 %335
    %339 = vset.pattern.permute.xlu0 0
    %340 = vperm.xlu0 %339, %v294
    %v341 = vpop.permute.xlu0 %340
    %344 = vset.pattern.permute.xlu0 0
    %345 = vperm.xlu0 %344, %v295
    %v346 = vpop.permute.xlu0 %345
    %349 = vset.pattern.permute.xlu0 0
    %350 = vperm.xlu0 %349, %v296
    %v351 = vpop.permute.xlu0 %350
    %354 = vset.pattern.permute.xlu0 0
    %355 = vperm.xlu0 %354, %v297
    %v356 = vpop.permute.xlu0 %355
    %359 = vset.pattern.permute.xlu0 0
    %360 = vperm.xlu0 %359, %v298
    %v361 = vpop.permute.xlu0 %360
    %364 = vset.pattern.permute.xlu0 0
    %365 = vperm.xlu0 %364, %v299
    %v366 = vpop.permute.xlu0 %365
    %369 = vset.pattern.permute.xlu0 0
    %370 = vperm.xlu0 %369, %v300
    %v371 = vpop.permute.xlu0 %370
    %374 = vset.pattern.permute.xlu0 0
    %375 = vperm.xlu0 %374, %v301
    %v376 = vpop.permute.xlu0 %375
    %379 = vset.pattern.permute.xlu0 0
    %380 = vperm.xlu0 %379, %v302
    %v381 = vpop.permute.xlu0 %380
    %v383 = vmul.f32 %v81, %v306
    %v384 = vmul.f32 %v82, %v311
    %v385 = vmul.f32 %v83, %v316
    %v386 = vmul.f32 %v84, %v321
    %v387 = vmul.f32 %v85, %v326
    %v388 = vmul.f32 %v86, %v331
    %v389 = vmul.f32 %v87, %v336
    %v390 = vmul.f32 %v88, %v341
    %v391 = vmul.f32 %v89, %v346
    %v392 = vmul.f32 %v90, %v351
    %v393 = vmul.f32 %v91, %v356
    %v394 = vmul.f32 %v92, %v361
    %v395 = vmul.f32 %v93, %v366
    %v396 = vmul.f32 %v94, %v371
    %v397 = vmul.f32 %v95, %v376
    %v398 = vmul.f32 %v96, %v381
    %v399 = vld [vmem:[#allocation3] sm:$0xff]
    %v400 = vld [vmem:[#allocation3 + $0x8] sm:$0xff]
    %v401 = vld [vmem:[#allocation3 + $0x10] sm:$0xff]
    %v402 = vld [vmem:[#allocation3 + $0x18] sm:$0xff]
    %v403 = vld [vmem:[#allocation3 + $0x20] sm:$0xff]
    %v404 = vld [vmem:[#allocation3 + $0x28] sm:$0xff]
    %v405 = vld [vmem:[#allocation3 + $0x30] sm:$0xff]
    %v406 = vld [vmem:[#allocation3 + $0x38] sm:$0xff]
    %v407 = vld [vmem:[#allocation3 + $0x40] sm:$0xff]
    %v408 = vld [vmem:[#allocation3 + $0x48] sm:$0xff]
    %v409 = vld [vmem:[#allocation3 + $0x50] sm:$0xff]
    %v410 = vld [vmem:[#allocation3 + $0x58] sm:$0xff]
    %v411 = vld [vmem:[#allocation3 + $0x60] sm:$0xff]
    %v412 = vld [vmem:[#allocation3 + $0x68] sm:$0xff]
    %v413 = vld [vmem:[#allocation3 + $0x70] sm:$0xff]
    %v414 = vld [vmem:[#allocation3 + $0x78] sm:$0xff]
    %v415 = vadd.f32 %v383, %v399
    %v416 = vadd.f32 %v384, %v400
    %v417 = vadd.f32 %v385, %v401
    %v418 = vadd.f32 %v386, %v402
    %v419 = vadd.f32 %v387, %v403
    %v420 = vadd.f32 %v388, %v404
    %v421 = vadd.f32 %v389, %v405
    %v422 = vadd.f32 %v390, %v406
    %v423 = vadd.f32 %v391, %v407
    %v424 = vadd.f32 %v392, %v408
    %v425 = vadd.f32 %v393, %v409
    %v426 = vadd.f32 %v394, %v410
    %v427 = vadd.f32 %v395, %v411
    %v428 = vadd.f32 %v396, %v412
    %v429 = vadd.f32 %v397, %v413
    %v430 = vadd.f32 %v398, %v414
    %v431 = vpack.c.bf16 %v416, %v415
    %v432 = vpack.c.bf16 %v418, %v417
    %v433 = vpack.c.bf16 %v420, %v419
    %v434 = vpack.c.bf16 %v422, %v421
    %v435 = vpack.c.bf16 %v424, %v423
    %v436 = vpack.c.bf16 %v426, %v425
    %v437 = vpack.c.bf16 %v428, %v427
    %v438 = vpack.c.bf16 %v430, %v429
    %v439 = vld [vmem:[#allocation6] sm:$0xff]
    %v440 = vld [vmem:[#allocation6 + $0x8] sm:$0xff]
    %v441 = vld [vmem:[#allocation6 + $0x10] sm:$0xff]
    %v442 = vld [vmem:[#allocation6 + $0x18] sm:$0xff]
    %v443 = vld [vmem:[#allocation6 + $0x20] sm:$0xff]
    %v444 = vld [vmem:[#allocation6 + $0x28] sm:$0xff]
    %v445 = vld [vmem:[#allocation6 + $0x30] sm:$0xff]
    %v446 = vld [vmem:[#allocation6 + $0x38] sm:$0xff]
    %v447 = vld [vmem:[#allocation6 + $0x40] sm:$0xff]
    %v448 = vld [vmem:[#allocation6 + $0x48] sm:$0xff]
    %v449 = vld [vmem:[#allocation6 + $0x50] sm:$0xff]
    %v450 = vld [vmem:[#allocation6 + $0x58] sm:$0xff]
    %v451 = vld [vmem:[#allocation6 + $0x60] sm:$0xff]
    %v452 = vld [vmem:[#allocation6 + $0x68] sm:$0xff]
    %v453 = vld [vmem:[#allocation6 + $0x70] sm:$0xff]
    %v454 = vld [vmem:[#allocation6 + $0x78] sm:$0xff]
    %v455 = vld [vmem:[%s6] sm:$0x3]
    %v457 = vlaneseq
    %v458 = vshrl.u32 %v457, 7
    %v459 = vsub.s32 0, %v458
    %v460 = vrot.slane %v455, %v459
    %v461 = vlaneseq
    %v462 = vshrl.u32 %v461, 7
    %v463 = vsub.s32 1, %v462
    %v464 = vrot.slane %v455, %v463
    %v483 = vunpack.c.l.b16 %v439
    %v484 = vunpack.c.h.b16 %v439
    %v485 = vunpack.c.l.b16 %v440
    %v486 = vunpack.c.h.b16 %v440
    %v487 = vunpack.c.l.b16 %v441
    %v488 = vunpack.c.h.b16 %v441
    %v489 = vunpack.c.l.b16 %v442
    %v490 = vunpack.c.h.b16 %v442
    %v491 = vunpack.c.l.b16 %v443
    %v492 = vunpack.c.h.b16 %v443
    %v493 = vunpack.c.l.b16 %v444
    %v494 = vunpack.c.h.b16 %v444
    %v495 = vunpack.c.l.b16 %v445
    %v496 = vunpack.c.h.b16 %v445
    %v497 = vunpack.c.l.b16 %v446
    %v498 = vunpack.c.h.b16 %v446
    %v499 = vunpack.c.l.b16 %v447
    %v500 = vunpack.c.h.b16 %v447
    %v501 = vunpack.c.l.b16 %v448
    %v502 = vunpack.c.h.b16 %v448
    %v503 = vunpack.c.l.b16 %v449
    %v504 = vunpack.c.h.b16 %v449
    %v505 = vunpack.c.l.b16 %v450
    %v506 = vunpack.c.h.b16 %v450
    %v507 = vunpack.c.l.b16 %v451
    %v508 = vunpack.c.h.b16 %v451
    %v509 = vunpack.c.l.b16 %v452
    %v510 = vunpack.c.h.b16 %v452
    %v511 = vunpack.c.l.b16 %v453
    %v512 = vunpack.c.h.b16 %v453
    %v513 = vunpack.c.l.b16 %v454
    %v514 = vunpack.c.h.b16 %v454
    %v515 = vpack.c.b16 %v485, %v483
    %v516 = vpack.c.b16 %v486, %v484
    %v517 = vpack.c.b16 %v489, %v487
    %v518 = vpack.c.b16 %v490, %v488
    %v519 = vpack.c.b16 %v493, %v491
    %v520 = vpack.c.b16 %v494, %v492
    %v521 = vpack.c.b16 %v497, %v495
    %v522 = vpack.c.b16 %v498, %v496
    %v523 = vpack.c.b16 %v501, %v499
    %v524 = vpack.c.b16 %v502, %v500
    %v525 = vpack.c.b16 %v505, %v503
    %v526 = vpack.c.b16 %v506, %v504
    %v527 = vpack.c.b16 %v509, %v507
    %v528 = vpack.c.b16 %v510, %v508
    %v529 = vpack.c.b16 %v513, %v511
    %v530 = vpack.c.b16 %v514, %v512
    %547 = vmatprep.subr.bf16.mxu0 %v516
    %548 = vmatpush1.bf16.msra.mxu0 %v515
    %549 = vmatprep.subr.bf16.mxu0 %v518
    %550 = vmatpush1.bf16.msra.mxu0 %v517
    %551 = vmatprep.subr.bf16.mxu0 %v520
    %552 = vmatpush1.bf16.msra.mxu0 %v519
    %553 = vmatprep.subr.bf16.mxu0 %v522
    %554 = vmatpush1.bf16.msra.mxu0 %v521
    %555 = vmatprep.subr.bf16.mxu0 %v524
    %556 = vmatpush1.bf16.msra.mxu0 %v523
    %557 = vmatprep.subr.bf16.mxu0 %v526
    %558 = vmatpush1.bf16.msra.mxu0 %v525
    %559 = vmatprep.subr.bf16.mxu0 %v528
    %560 = vmatpush1.bf16.msra.mxu0 %v527
    %561 = vmatprep.subr.bf16.mxu0 %v530
    %562 = vmatpush1.bf16.msra.mxu0 %v529
    %563 = vmatprep.subr.bf16.mxu0 0
    %564 = vmatpush1.bf16.msra.mxu0 0
    %565 = vmatprep.subr.bf16.mxu0 0
    %566 = vmatpush1.bf16.msra.mxu0 0
    %567 = vmatprep.subr.bf16.mxu0 0
    %568 = vmatpush1.bf16.msra.mxu0 0
    %569 = vmatprep.subr.bf16.mxu0 0
    %570 = vmatpush1.bf16.msra.mxu0 0
    %571 = vmatprep.subr.bf16.mxu0 0
    %572 = vmatpush1.bf16.msra.mxu0 0
    %573 = vmatprep.subr.bf16.mxu0 0
    %574 = vmatpush1.bf16.msra.mxu0 0
    %575 = vmatprep.subr.bf16.mxu0 0
    %576 = vmatpush1.bf16.msra.mxu0 0
    %577 = vmatprep.subr.bf16.mxu0 0
    %578 = vmatpush1.bf16.msra.mxu0 0
    %579 = vmatprep.mubr.bf16.mxu0 0
    %580 = vmatmul.mubr.bf16.gmra.mrb[0].mxu0 %v431
    %v581 = vpop.f32.mrb[0].mxu0
    %v582 = vadd.f32 %v460, %v581
    %v583 = vpop.f32.mrb[0].mxu0
    %v584 = vadd.f32 %v464, %v583
    %v585 = vpop.f32.mrb[0].mxu0
    %v586 = vadd.f32 %v460, %v585
    %v587 = vpop.f32.mrb[0].mxu0
    %v588 = vadd.f32 %v464, %v587
    %589 = vmatprep.mubr.bf16.mxu0 0
    %590 = vmatmul.mubr.bf16.gmra.mrb[0].mxu0 %v432
    %v591 = vpop.f32.mrb[0].mxu0
    %v592 = vadd.f32 %v460, %v591
    %v593 = vpop.f32.mrb[0].mxu0
    %v594 = vadd.f32 %v464, %v593
    %v595 = vpop.f32.mrb[0].mxu0
    %v596 = vadd.f32 %v460, %v595
    %v597 = vpop.f32.mrb[0].mxu0
    %v598 = vadd.f32 %v464, %v597
    %599 = vmatprep.mubr.bf16.mxu0 0
    %600 = vmatmul.mubr.bf16.gmra.mrb[0].mxu0 %v433
    %v601 = vpop.f32.mrb[0].mxu0
    %v602 = vadd.f32 %v460, %v601
    %v603 = vpop.f32.mrb[0].mxu0
    %v604 = vadd.f32 %v464, %v603
    %v605 = vpop.f32.mrb[0].mxu0
    %v606 = vadd.f32 %v460, %v605
    %v607 = vpop.f32.mrb[0].mxu0
    %v608 = vadd.f32 %v464, %v607
    %609 = vmatprep.mubr.bf16.mxu0 0
    %610 = vmatmul.mubr.bf16.gmra.mrb[0].mxu0 %v434
    %v611 = vpop.f32.mrb[0].mxu0
    %v612 = vadd.f32 %v460, %v611
    %v613 = vpop.f32.mrb[0].mxu0
    %v614 = vadd.f32 %v464, %v613
    %v615 = vpop.f32.mrb[0].mxu0
    %v616 = vadd.f32 %v460, %v615
    %v617 = vpop.f32.mrb[0].mxu0
    %v618 = vadd.f32 %v464, %v617
    %619 = vmatprep.mubr.bf16.mxu0 0
    %620 = vmatmul.mubr.bf16.gmra.mrb[0].mxu0 %v435
    %v621 = vpop.f32.mrb[0].mxu0
    %v622 = vadd.f32 %v460, %v621
    %v623 = vpop.f32.mrb[0].mxu0
    %v624 = vadd.f32 %v464, %v623
    %v625 = vpop.f32.mrb[0].mxu0
    %v626 = vadd.f32 %v460, %v625
    %v627 = vpop.f32.mrb[0].mxu0
    %v628 = vadd.f32 %v464, %v627
    %629 = vmatprep.mubr.bf16.mxu0 0
    %630 = vmatmul.mubr.bf16.gmra.mrb[0].mxu0 %v436
    %v631 = vpop.f32.mrb[0].mxu0
    %v632 = vadd.f32 %v460, %v631
    %v633 = vpop.f32.mrb[0].mxu0
    %v634 = vadd.f32 %v464, %v633
    %v635 = vpop.f32.mrb[0].mxu0
    %v636 = vadd.f32 %v460, %v635
    %v637 = vpop.f32.mrb[0].mxu0
    %v638 = vadd.f32 %v464, %v637
    %639 = vmatprep.mubr.bf16.mxu0 0
    %640 = vmatmul.mubr.bf16.gmra.mrb[0].mxu0 %v437
    %v641 = vpop.f32.mrb[0].mxu0
    %v642 = vadd.f32 %v460, %v641
    %v643 = vpop.f32.mrb[0].mxu0
    %v644 = vadd.f32 %v464, %v643
    %v645 = vpop.f32.mrb[0].mxu0
    %v646 = vadd.f32 %v460, %v645
    %v647 = vpop.f32.mrb[0].mxu0
    %v648 = vadd.f32 %v464, %v647
    %649 = vmatprep.mubr.bf16.mxu0 0
    %650 = vmatmul.mubr.bf16.gmra.mrb[0].mxu0 %v438
    %v651 = vpop.f32.mrb[0].mxu0
    %v652 = vadd.f32 %v460, %v651
    %v653 = vpop.f32.mrb[0].mxu0
    %v654 = vadd.f32 %v464, %v653
    %v655 = vpop.f32.mrb[0].mxu0
    %v656 = vadd.f32 %v460, %v655
    %v657 = vpop.f32.mrb[0].mxu0
    %v658 = vadd.f32 %v464, %v657
    %659 = vdwg.mxu0
    %v660 = vmul.f32 %v582, 0.17677669
    %v661 = vmul.f32 %v586, 0.17677669
    %v662 = vmul.f32 %v592, 0.17677669
    %v663 = vmul.f32 %v596, 0.17677669
    %v664 = vmul.f32 %v602, 0.17677669
    %v665 = vmul.f32 %v606, 0.17677669
    %v666 = vmul.f32 %v612, 0.17677669
    %v667 = vmul.f32 %v616, 0.17677669
    %v668 = vmul.f32 %v622, 0.17677669
    %v669 = vmul.f32 %v626, 0.17677669
    %v670 = vmul.f32 %v632, 0.17677669
    %v671 = vmul.f32 %v636, 0.17677669
    %v672 = vmul.f32 %v642, 0.17677669
    %v673 = vmul.f32 %v646, 0.17677669
    %v674 = vmul.f32 %v652, 0.17677669
    %v675 = vmul.f32 %v656, 0.17677669
    %v676 = vpack.c.bf16 %v661, %v660
    %v677 = vpack.c.bf16 %v663, %v662
    %v678 = vpack.c.bf16 %v665, %v664
    %v679 = vpack.c.bf16 %v667, %v666
    %v680 = vpack.c.bf16 %v669, %v668
    %v681 = vpack.c.bf16 %v671, %v670
    %v682 = vpack.c.bf16 %v673, %v672
    %v683 = vpack.c.bf16 %v675, %v674
    %v692 = vunpack.c.l.b16 %v676
    %v693 = vunpack.c.h.b16 %v676
    %v694 = vunpack.c.l.b16 %v677
    %v695 = vunpack.c.h.b16 %v677
    %v696 = vunpack.c.l.b16 %v678
    %v697 = vunpack.c.h.b16 %v678
    %v698 = vunpack.c.l.b16 %v679
    %v699 = vunpack.c.h.b16 %v679
    %v700 = vunpack.c.l.b16 %v680
    %v701 = vunpack.c.h.b16 %v680
    %v702 = vunpack.c.l.b16 %v681
    %v703 = vunpack.c.h.b16 %v681
    %v704 = vunpack.c.l.b16 %v682
    %v705 = vunpack.c.h.b16 %v682
    %v706 = vunpack.c.l.b16 %v683
    %v707 = vunpack.c.h.b16 %v683
    %v708 = vpack.c.b16 %v692, %v692
    %v709 = vpack.c.b16 %v693, %v693
    %v710 = vpack.c.b16 %v694, %v694
    %v711 = vpack.c.b16 %v695, %v695
    %v712 = vpack.c.b16 %v696, %v696
    %v713 = vpack.c.b16 %v697, %v697
    %v714 = vpack.c.b16 %v698, %v698
    %v715 = vpack.c.b16 %v699, %v699
    %v716 = vpack.c.b16 %v700, %v700
    %v717 = vpack.c.b16 %v701, %v701
    %v718 = vpack.c.b16 %v702, %v702
    %v719 = vpack.c.b16 %v703, %v703
    %v720 = vpack.c.b16 %v704, %v704
    %v721 = vpack.c.b16 %v705, %v705
    %v722 = vpack.c.b16 %v706, %v706
    %v723 = vpack.c.b16 %v707, %v707
    %740 = vst [vmem:[#allocation9] sm:$0xf] %v708
    %741 = vst [vmem:[#allocation9 + $0x4] sm:$0xf] %v709
    %742 = vst [vmem:[#allocation9 + $0x8] sm:$0xf] %v710
    %743 = vst [vmem:[#allocation9 + $0xc] sm:$0xf] %v711
    %744 = vst [vmem:[#allocation9 + $0x10] sm:$0xf] %v712
    %745 = vst [vmem:[#allocation9 + $0x14] sm:$0xf] %v713
    %746 = vst [vmem:[#allocation9 + $0x18] sm:$0xf] %v714
    %747 = vst [vmem:[#allocation9 + $0x1c] sm:$0xf] %v715
    %748 = vst [vmem:[#allocation9 + $0x20] sm:$0xf] %v716
    %749 = vst [vmem:[#allocation9 + $0x24] sm:$0xf] %v717
    %750 = vst [vmem:[#allocation9 + $0x28] sm:$0xf] %v718
    %751 = vst [vmem:[#allocation9 + $0x2c] sm:$0xf] %v719
    %752 = vst [vmem:[#allocation9 + $0x30] sm:$0xf] %v720
    %753 = vst [vmem:[#allocation9 + $0x34] sm:$0xf] %v721
    %754 = vst [vmem:[#allocation9 + $0x38] sm:$0xf] %v722
    %755 = vst [vmem:[#allocation9 + $0x3c] sm:$0xf] %v723
    %v756 = vpack.c.bf16 %v588, %v584
    %v757 = vpack.c.bf16 %v598, %v594
    %v758 = vpack.c.bf16 %v608, %v604
    %v759 = vpack.c.bf16 %v618, %v614
    %v760 = vpack.c.bf16 %v628, %v624
    %v761 = vpack.c.bf16 %v638, %v634
    %v762 = vpack.c.bf16 %v648, %v644
    %v763 = vpack.c.bf16 %v658, %v654
    %v772 = vunpack.c.l.b16 %v756
    %v773 = vunpack.c.h.b16 %v756
    %v774 = vunpack.c.l.b16 %v757
    %v775 = vunpack.c.h.b16 %v757
    %v776 = vunpack.c.l.b16 %v758
    %v777 = vunpack.c.h.b16 %v758
    %v778 = vunpack.c.l.b16 %v759
    %v779 = vunpack.c.h.b16 %v759
    %v780 = vunpack.c.l.b16 %v760
    %v781 = vunpack.c.h.b16 %v760
    %v782 = vunpack.c.l.b16 %v761
    %v783 = vunpack.c.h.b16 %v761
    %v784 = vunpack.c.l.b16 %v762
    %v785 = vunpack.c.h.b16 %v762
    %v786 = vunpack.c.l.b16 %v763
    %v787 = vunpack.c.h.b16 %v763
    %v788 = vpack.c.b16 %v772, %v772
    %v789 = vpack.c.b16 %v773, %v773
    %v790 = vpack.c.b16 %v774, %v774
    %v791 = vpack.c.b16 %v775, %v775
    %v792 = vpack.c.b16 %v776, %v776
    %v793 = vpack.c.b16 %v777, %v777
    %v794 = vpack.c.b16 %v778, %v778
    %v795 = vpack.c.b16 %v779, %v779
    %v796 = vpack.c.b16 %v780, %v780
    %v797 = vpack.c.b16 %v781, %v781
    %v798 = vpack.c.b16 %v782, %v782
    %v799 = vpack.c.b16 %v783, %v783
    %v800 = vpack.c.b16 %v784, %v784
    %v801 = vpack.c.b16 %v785, %v785
    %v802 = vpack.c.b16 %v786, %v786
    %v803 = vpack.c.b16 %v787, %v787
    %820 = vst [vmem:[#allocation10] sm:$0xf] %v788
    %821 = vst [vmem:[#allocation10 + $0x4] sm:$0xf] %v789
    %822 = vst [vmem:[#allocation10 + $0x8] sm:$0xf] %v790
    %823 = vst [vmem:[#allocation10 + $0xc] sm:$0xf] %v791
    %824 = vst [vmem:[#allocation10 + $0x10] sm:$0xf] %v792
    %825 = vst [vmem:[#allocation10 + $0x14] sm:$0xf] %v793
    %826 = vst [vmem:[#allocation10 + $0x18] sm:$0xf] %v794
    %827 = vst [vmem:[#allocation10 + $0x1c] sm:$0xf] %v795
    %828 = vst [vmem:[#allocation10 + $0x20] sm:$0xf] %v796
    %829 = vst [vmem:[#allocation10 + $0x24] sm:$0xf] %v797
    %830 = vst [vmem:[#allocation10 + $0x28] sm:$0xf] %v798
    %831 = vst [vmem:[#allocation10 + $0x2c] sm:$0xf] %v799
    %832 = vst [vmem:[#allocation10 + $0x30] sm:$0xf] %v800
    %833 = vst [vmem:[#allocation10 + $0x34] sm:$0xf] %v801
    %834 = vst [vmem:[#allocation10 + $0x38] sm:$0xf] %v802
    %835 = vst [vmem:[#allocation10 + $0x3c] sm:$0xf] %v803
    %v836 = vpack.c.bf16 %v384, %v383
    %v837 = vpack.c.bf16 %v386, %v385
    %v838 = vpack.c.bf16 %v388, %v387
    %v839 = vpack.c.bf16 %v390, %v389
    %v840 = vpack.c.bf16 %v392, %v391
    %v841 = vpack.c.bf16 %v394, %v393
    %v842 = vpack.c.bf16 %v396, %v395
    %v843 = vpack.c.bf16 %v398, %v397
    %v844 = vld [vmem:[#allocation8] sm:$0xf]
    %v845 = vld [vmem:[#allocation8 + $0x4] sm:$0xf]
    %v846 = vld [vmem:[#allocation8 + $0x8] sm:$0xf]
    %v847 = vld [vmem:[#allocation8 + $0xc] sm:$0xf]
    %v848 = vld [vmem:[#allocation8 + $0x10] sm:$0xf]
    %v849 = vld [vmem:[#allocation8 + $0x14] sm:$0xf]
    %v850 = vld [vmem:[#allocation8 + $0x18] sm:$0xf]
    %v851 = vld [vmem:[#allocation8 + $0x1c] sm:$0xf]
    %v852 = vld [vmem:[#allocation8 + $0x20] sm:$0xf]
    %v853 = vld [vmem:[#allocation8 + $0x24] sm:$0xf]
    %v854 = vld [vmem:[#allocation8 + $0x28] sm:$0xf]
    %v855 = vld [vmem:[#allocation8 + $0x2c] sm:$0xf]
    %v856 = vld [vmem:[#allocation8 + $0x30] sm:$0xf]
    %v857 = vld [vmem:[#allocation8 + $0x34] sm:$0xf]
    %v858 = vld [vmem:[#allocation8 + $0x38] sm:$0xf]
    %v859 = vld [vmem:[#allocation8 + $0x3c] sm:$0xf]
    %v860 = vld [vmem:[%s8] sm:$0x1]
    %v862 = vlaneseq
    %v863 = vshrl.u32 %v862, 7
    %v864 = vsub.s32 0, %v863
    %v865 = vrot.slane %v860, %v864
    %v883 = vunpack.c.l.b16 %v844
    %v884 = vunpack.c.l.b16 %v845
    %v885 = vunpack.c.l.b16 %v846
    %v886 = vunpack.c.l.b16 %v847
    %v887 = vunpack.c.l.b16 %v848
    %v888 = vunpack.c.l.b16 %v849
    %v889 = vunpack.c.l.b16 %v850
    %v890 = vunpack.c.l.b16 %v851
    %v891 = vunpack.c.l.b16 %v852
    %v892 = vunpack.c.l.b16 %v853
    %v893 = vunpack.c.l.b16 %v854
    %v894 = vunpack.c.l.b16 %v855
    %v895 = vunpack.c.l.b16 %v856
    %v896 = vunpack.c.l.b16 %v857
    %v897 = vunpack.c.l.b16 %v858
    %v898 = vunpack.c.l.b16 %v859
    %v899 = vpack.c.b16 %v884, %v883
    %v900 = vpack.c.b16 %v886, %v885
    %v901 = vpack.c.b16 %v888, %v887
    %v902 = vpack.c.b16 %v890, %v889
    %v903 = vpack.c.b16 %v892, %v891
    %v904 = vpack.c.b16 %v894, %v893
    %v905 = vpack.c.b16 %v896, %v895
    %v906 = vpack.c.b16 %v898, %v897
    %915 = vmatprep.subr.bf16.mxu0 0
    %916 = vmatpush1.bf16.msra.mxu0 %v899
    %917 = vmatprep.subr.bf16.mxu0 0
    %918 = vmatpush1.bf16.msra.mxu0 %v900
    %919 = vmatprep.subr.bf16.mxu0 0
    %920 = vmatpush1.bf16.msra.mxu0 %v901
    %921 = vmatprep.subr.bf16.mxu0 0
    %922 = vmatpush1.bf16.msra.mxu0 %v902
    %923 = vmatprep.subr.bf16.mxu0 0
    %924 = vmatpush1.bf16.msra.mxu0 %v903
    %925 = vmatprep.subr.bf16.mxu0 0
    %926 = vmatpush1.bf16.msra.mxu0 %v904
    %927 = vmatprep.subr.bf16.mxu0 0
    %928 = vmatpush1.bf16.msra.mxu0 %v905
    %929 = vmatprep.subr.bf16.mxu0 0
    %930 = vmatpush1.bf16.msra.mxu0 %v906
    %931 = vmatprep.subr.bf16.mxu0 0
    %932 = vmatpush1.bf16.msra.mxu0 0
    %933 = vmatprep.subr.bf16.mxu0 0
    %934 = vmatpush1.bf16.msra.mxu0 0
    %935 = vmatprep.subr.bf16.mxu0 0
    %936 = vmatpush1.bf16.msra.mxu0 0
    %937 = vmatprep.subr.bf16.mxu0 0
    %938 = vmatpush1.bf16.msra.mxu0 0
    %939 = vmatprep.subr.bf16.mxu0 0
    %940 = vmatpush1.bf16.msra.mxu0 0
    %941 = vmatprep.subr.bf16.mxu0 0
    %942 = vmatpush1.bf16.msra.mxu0 0
    %943 = vmatprep.subr.bf16.mxu0 0
    %944 = vmatpush1.bf16.msra.mxu0 0
    %945 = vmatprep.subr.bf16.mxu0 0
    %946 = vmatpush1.bf16.msra.mxu0 0
    %947 = vmatprep.mubr.bf16.mxu0 0
    %948 = vmatmul.mubr.bf16.gmra.mrb[0].mxu0 %v836
    %v949 = vpop.f32.mrb[0].mxu0
    %v950 = vadd.f32 %v865, %v949
    %v951 = vpop.f32.mrb[0].mxu0
    %v952 = vpop.f32.mrb[0].mxu0
    %v953 = vadd.f32 %v865, %v952
    %v954 = vpop.f32.mrb[0].mxu0
    %955 = vmatprep.mubr.bf16.mxu0 0
    %956 = vmatmul.mubr.bf16.gmra.mrb[0].mxu0 %v837
    %v957 = vpop.f32.mrb[0].mxu0
    %v958 = vadd.f32 %v865, %v957
    %v959 = vpop.f32.mrb[0].mxu0
    %v960 = vpop.f32.mrb[0].mxu0
    %v961 = vadd.f32 %v865, %v960
    %v962 = vpop.f32.mrb[0].mxu0
    %963 = vmatprep.mubr.bf16.mxu0 0
    %964 = vmatmul.mubr.bf16.gmra.mrb[0].mxu0 %v838
    %v965 = vpop.f32.mrb[0].mxu0
    %v966 = vadd.f32 %v865, %v965
    %v967 = vpop.f32.mrb[0].mxu0
    %v968 = vpop.f32.mrb[0].mxu0
    %v969 = vadd.f32 %v865, %v968
    %v970 = vpop.f32.mrb[0].mxu0
    %971 = vmatprep.mubr.bf16.mxu0 0
    %972 = vmatmul.mubr.bf16.gmra.mrb[0].mxu0 %v839
    %v973 = vpop.f32.mrb[0].mxu0
    %v974 = vadd.f32 %v865, %v973
    %v975 = vpop.f32.mrb[0].mxu0
    %v976 = vpop.f32.mrb[0].mxu0
    %v977 = vadd.f32 %v865, %v976
    %v978 = vpop.f32.mrb[0].mxu0
    %979 = vmatprep.mubr.bf16.mxu0 0
    %980 = vmatmul.mubr.bf16.gmra.mrb[0].mxu0 %v840
    %v981 = vpop.f32.mrb[0].mxu0
    %v982 = vadd.f32 %v865, %v981
    %v983 = vpop.f32.mrb[0].mxu0
    %v984 = vpop.f32.mrb[0].mxu0
    %v985 = vadd.f32 %v865, %v984
    %v986 = vpop.f32.mrb[0].mxu0
    %987 = vmatprep.mubr.bf16.mxu0 0
    %988 = vmatmul.mubr.bf16.gmra.mrb[0].mxu0 %v841
    %v989 = vpop.f32.mrb[0].mxu0
    %v990 = vadd.f32 %v865, %v989
    %v991 = vpop.f32.mrb[0].mxu0
    %v992 = vpop.f32.mrb[0].mxu0
    %v993 = vadd.f32 %v865, %v992
    %v994 = vpop.f32.mrb[0].mxu0
    %995 = vmatprep.mubr.bf16.mxu0 0
    %996 = vmatmul.mubr.bf16.gmra.mrb[0].mxu0 %v842
    %v997 = vpop.f32.mrb[0].mxu0
    %v998 = vadd.f32 %v865, %v997
    %v999 = vpop.f32.mrb[0].mxu0
    %v1000 = vpop.f32.mrb[0].mxu0
    %v1001 = vadd.f32 %v865, %v1000
    %v1002 = vpop.f32.mrb[0].mxu0
    %1003 = vmatprep.mubr.bf16.mxu0 0
    %1004 = vmatmul.mubr.bf16.gmra.mrb[0].mxu0 %v843
    %v1005 = vpop.f32.mrb[0].mxu0
    %v1006 = vadd.f32 %v865, %v1005
    %v1007 = vpop.f32.mrb[0].mxu0
    %v1008 = vpop.f32.mrb[0].mxu0
    %v1009 = vadd.f32 %v865, %v1008
    %v1010 = vpop.f32.mrb[0].mxu0
    %1011 = vdwg.mxu0
    %v1012 = vpack.c.bf16 %v953, %v950
    %v1013 = vpack.c.bf16 %v961, %v958
    %v1014 = vpack.c.bf16 %v969, %v966
    %v1015 = vpack.c.bf16 %v977, %v974
    %v1016 = vpack.c.bf16 %v985, %v982
    %v1017 = vpack.c.bf16 %v993, %v990
    %v1018 = vpack.c.bf16 %v1001, %v998
    %v1019 = vpack.c.bf16 %v1009, %v1006
    %v1028 = vunpack.c.l.b16 %v1012
    %v1029 = vunpack.c.h.b16 %v1012
    %v1030 = vunpack.c.l.b16 %v1013
    %v1031 = vunpack.c.h.b16 %v1013
    %v1032 = vunpack.c.l.b16 %v1014
    %v1033 = vunpack.c.h.b16 %v1014
    %v1034 = vunpack.c.l.b16 %v1015
    %v1035 = vunpack.c.h.b16 %v1015
    %v1036 = vunpack.c.l.b16 %v1016
    %v1037 = vunpack.c.h.b16 %v1016
    %v1038 = vunpack.c.l.b16 %v1017
    %v1039 = vunpack.c.h.b16 %v1017
    %v1040 = vunpack.c.l.b16 %v1018
    %v1041 = vunpack.c.h.b16 %v1018
    %v1042 = vunpack.c.l.b16 %v1019
    %v1043 = vunpack.c.h.b16 %v1019
    %v1044 = vpack.c.b16 %v1028, %v1028
    %v1045 = vpack.c.b16 %v1029, %v1029
    %v1046 = vpack.c.b16 %v1030, %v1030
    %v1047 = vpack.c.b16 %v1031, %v1031
    %v1048 = vpack.c.b16 %v1032, %v1032
    %v1049 = vpack.c.b16 %v1033, %v1033
    %v1050 = vpack.c.b16 %v1034, %v1034
    %v1051 = vpack.c.b16 %v1035, %v1035
    %v1052 = vpack.c.b16 %v1036, %v1036
    %v1053 = vpack.c.b16 %v1037, %v1037
    %v1054 = vpack.c.b16 %v1038, %v1038
    %v1055 = vpack.c.b16 %v1039, %v1039
    %v1056 = vpack.c.b16 %v1040, %v1040
    %v1057 = vpack.c.b16 %v1041, %v1041
    %v1058 = vpack.c.b16 %v1042, %v1042
    %v1059 = vpack.c.b16 %v1043, %v1043
    %1076 = vst [vmem:[#allocation12] sm:$0xf] %v1044
    %1077 = vst [vmem:[#allocation12 + $0x4] sm:$0xf] %v1045
    %1078 = vst [vmem:[#allocation12 + $0x8] sm:$0xf] %v1046
    %1079 = vst [vmem:[#allocation12 + $0xc] sm:$0xf] %v1047
    %1080 = vst [vmem:[#allocation12 + $0x10] sm:$0xf] %v1048
    %1081 = vst [vmem:[#allocation12 + $0x14] sm:$0xf] %v1049
    %1082 = vst [vmem:[#allocation12 + $0x18] sm:$0xf] %v1050
    %1083 = vst [vmem:[#allocation12 + $0x1c] sm:$0xf] %v1051
    %1084 = vst [vmem:[#allocation12 + $0x20] sm:$0xf] %v1052
    %1085 = vst [vmem:[#allocation12 + $0x24] sm:$0xf] %v1053
    %1086 = vst [vmem:[#allocation12 + $0x28] sm:$0xf] %v1054
    %1087 = vst [vmem:[#allocation12 + $0x2c] sm:$0xf] %v1055
    %1088 = vst [vmem:[#allocation12 + $0x30] sm:$0xf] %v1056
    %1089 = vst [vmem:[#allocation12 + $0x34] sm:$0xf] %v1057
    %1090 = vst [vmem:[#allocation12 + $0x38] sm:$0xf] %v1058
    %1091 = vst [vmem:[#allocation12 + $0x3c] sm:$0xf] %v1059
    // Predicated region
    $region50: #{tpu_custom_call.1} parent=1 // pred_check
      _
    $region51: #{tpu_custom_call.1} parent=1 // pred_check_branch
      %1093 = sbr.rel (0) target = $region53
    $region52: #{tpu_custom_call.1} parent=1 // pred_region
      %s1095 = ssub.s32 1024, 1024
      %1096 = vsyncadd [#allocation5], %s1095
      %s1097 = sshll.u32 [#allocation9], 4
      %s1098 = int_to_ptr.vmem [resolvable:$true] %s1097
      %1103 = dma.vmem_to_hbm [thread:$0]  %s1098, 1024, %s9, [#allocation5], 64, 64, 4
    $region53: #{tpu_custom_call.1} parent=1 // pred_fallthru
      _
    // Predicated region
    $region54: #{tpu_custom_call.1} parent=1 // pred_check
      _
    $region55: #{tpu_custom_call.1} parent=1 // pred_check_branch
      %1105 = sbr.rel (0) target = $region57
    $region56: #{tpu_custom_call.1} parent=1 // pred_region
      %s1107 = ssub.s32 1024, 1024
      %1108 = vsyncadd [#allocation11], %s1107
      %s1109 = sshll.u32 [#allocation10], 4
      %s1110 = int_to_ptr.vmem [resolvable:$true] %s1109
      %1115 = dma.vmem_to_hbm [thread:$0]  %s1110, 1024, %s10, [#allocation11], 64, 64, 4
    $region57: #{tpu_custom_call.1} parent=1 // pred_fallthru
      _
    // Predicated region
    $region58: #{tpu_custom_call.1} parent=1 // pred_check
      _
    $region59: #{tpu_custom_call.1} parent=1 // pred_check_branch
      %1117 = sbr.rel (0) target = $region61
    $region60: #{tpu_custom_call.1} parent=1 // pred_region
      %s1119 = ssub.s32 1024, 1024
      %1120 = vsyncadd [#allocation11], %s1119
      %s1121 = sshll.u32 [#allocation12], 4
      %s1122 = int_to_ptr.vmem [resolvable:$true] %s1121
      %1127 = dma.vmem_to_hbm [thread:$0]  %s1122, 1024, %s11, [#allocation11], 64, 64, 4
    $region61: #{tpu_custom_call.1} parent=1 // pred_fallthru
      _
    // Predicated region
    $region62: #{tpu_custom_call.1} parent=1 // pred_check
      _
    $region63: #{tpu_custom_call.1} parent=1 // pred_check_branch
      %1129 = sbr.rel (0) target = $region65
    $region64: #{tpu_custom_call.1} parent=1 // pred_region
      %1130 = dma.done [#allocation5], 1024
    $region65: #{tpu_custom_call.1} parent=1 // pred_fallthru
      _
    // Predicated region
    $region66: #{tpu_custom_call.1} parent=1 // pred_check
      _
    $region67: #{tpu_custom_call.1} parent=1 // pred_check_branch
      %1132 = sbr.rel (0) target = $region69
    $region68: #{tpu_custom_call.1} parent=1 // pred_region
      %1133 = dma.done [#allocation11], 1024
    $region69: #{tpu_custom_call.1} parent=1 // pred_fallthru
      _
    // Predicated region
    $region70: #{tpu_custom_call.1} parent=1 // pred_check
      _
    $region71: #{tpu_custom_call.1} parent=1 // pred_check_branch
      %1135 = sbr.rel (0) target = $region73
    $region72: #{tpu_custom_call.1} parent=1 // pred_region
      %1136 = dma.done [#allocation11], 1024
    $region73: #{tpu_custom_call.1} parent=1 // pred_fallthru
      _
    %1137 = vsyncpa [#allocation4], 1
    %1138 = vsyncpa [#allocation7], 1
    %1139 = vsyncpa [#allocation5], 1
    %1140 = vsyncpa [#allocation11], 1

</llo_original>
